<compile_context>
chip_gen: v7x
topology: tpu7x:2x2x1
jax: 0.10.0
libtpu: 0.0.40
codegen_flags: <defaults>
</compile_context>

<pallas_src>
import functools
import math

import jax
import jax.numpy as jnp
from jax import lax
from jax.experimental import pallas as pl
from jax.experimental.pallas import tpu as pltpu


# ---------------------------------------------------------------------------
# Fused kernel: conv (MXU matmul per image) -> global BN stats -> BN + GELU.
# ---------------------------------------------------------------------------
def _cba_fused_kernel(p_ref, w_ref, gamma_ref, beta_ref, o_ref, *, inv_m, eps):
    n = pl.program_id(0)

    # Conv for image n as an MXU matmul: [Cout, K] @ [K, S] -> [Cout, S] (f32).
    y = jnp.dot(w_ref[...], p_ref[0], preferred_element_type=jnp.float32)
    # Output block is the FULL array with a constant index_map, so it stays
    # resident in VMEM across the whole grid; this is only a VMEM store.
    o_ref[n] = y

    # Finalize on the last grid step: the full raw conv output is resident.
    @pl.when(n == pl.num_programs(0) - 1)
    def _finalize():
        yall = o_ref[...]                                  # (N, Cout, S) f32
        # Training-mode BatchNorm: biased stats over batch + spatial dims.
        per_img = jnp.sum(yall, axis=2, keepdims=True)     # lane reduce (XLU)
        mean = jnp.sum(per_img, axis=0, keepdims=True) * inv_m       # (1,C,1)
        diff = yall - mean
        var = jnp.sum(jnp.sum(diff * diff, axis=2, keepdims=True),
                      axis=0, keepdims=True) * inv_m       # centered: no cancellation
        scale = gamma_ref[...] * lax.rsqrt(var + eps)      # (1, C, 1)
        shift = beta_ref[...] - scale * mean
        z = yall * scale + shift
        # Exact GELU (PyTorch nn.GELU default): 0.5*z*(1 + erf(z/sqrt(2))).
        o_ref[...] = 0.5 * z * (1.0 + lax.erf(z * (1.0 / math.sqrt(2.0))))


def cba_forward(x_nchw, w_oihw, conv_bias, bn_gamma, bn_beta, *,
                stride=2, padding=1, eps=1e-5, compute_dtype=jnp.float32):
    N, Cin, H, W = x_nchw.shape
    Cout, _, KH, KW = w_oihw.shape
    Ho = (H + 2 * padding - KH) // stride + 1
    Wo = (W + 2 * padding - KW) // stride + 1
    S = Ho * Wo
    K = KH * KW * Cin
    M = N * S

    # The conv bias cancels exactly under training-mode BatchNorm (the batch
    # mean removes any per-channel constant) -> drop the wasted add.
    del conv_bias
    # TODO(synk): BatchNorm running_mean/running_var buffer updates (training
    # side-state) are not emitted; only the forward activation is produced.

    # im2col in transposed [N, K, S] layout built straight from NCHW (no
    # NCHW->NHWC transpose), so the kernel output comes back in NCHW for free.
    # TODO(synk): build these (kh, kw) slabs inside the kernel with strided
    # VMEM reads of the raw NCHW tile to avoid materializing im2col in HBM.
    xp = jnp.pad(x_nchw, ((0, 0), (0, 0),
                          (padding, padding), (padding, padding)))
    slabs = []
    for kh in range(KH):
        for kw in range(KW):
            slab = xp[:, :, kh:kh + stride * Ho:stride, kw:kw + stride * Wo:stride]
            slabs.append(slab.reshape(N, Cin, S))
    patches = jnp.concatenate(slabs, axis=1).astype(compute_dtype)   # (N, K, S)

    # Weight [Cout, Cin, KH, KW] -> [Cout, (kh, kw, cin)] matching patches' K order.
    w2d = jnp.transpose(w_oihw, (0, 2, 3, 1)).reshape(Cout, K).astype(compute_dtype)

    gamma = bn_gamma.astype(jnp.float32).reshape(1, Cout, 1)
    beta = bn_beta.astype(jnp.float32).reshape(1, Cout, 1)

    itemsize = jnp.dtype(compute_dtype).itemsize
    resident_out = N * Cout * S * 4
    vmem_need = (2 * K * S * itemsize          # double-buffered per-image patches
                 + 2 * Cout * K * itemsize     # resident weights (budget 2 bufs)
                 + 4 * Cout * 4 * 2            # gamma/beta
                 + 2 * resident_out)           # resident output (budget 2 bufs)
    if vmem_need > (48 << 20):
        # TODO(synk): spill path (two-pass: tiled conv + per-tile partial
        # stats so the M axis can run "parallel" across v7x's TensorCores,
        # then tiled BN+GELU) for outputs that do not fit VMEM.
        raise NotImplementedError("CBA fused kernel: output does not fit in VMEM")
    vmem_limit = int(min(max(vmem_need + (4 << 20), 8 << 20), 64 << 20))

    cost = pl.CostEstimate(
        flops=2 * N * Cout * K * S + 10 * N * Cout * S,
        transcendentals=N * Cout * S,
        bytes_accessed=int(N * K * S * itemsize + Cout * K * itemsize
                           + N * Cout * S * 4 + 4 * Cout * 4),
    )

    kernel = functools.partial(_cba_fused_kernel,
                               inv_m=1.0 / float(M), eps=float(eps))

    out = pl.pallas_call(
        kernel,
        out_shape=jax.ShapeDtypeStruct((N, Cout, S), jnp.float32),
        grid=(N,),
        in_specs=[
            pl.BlockSpec((1, K, S), lambda n: (n, 0, 0)),     # per-image patches
            pl.BlockSpec((Cout, K), lambda n: (0, 0)),        # weights (resident)
            pl.BlockSpec((1, Cout, 1), lambda n: (0, 0, 0)),  # gamma
            pl.BlockSpec((1, Cout, 1), lambda n: (0, 0, 0)),  # beta
        ],
        # Full-array output block + constant index_map -> resident in VMEM
        # across the batch grid; single HBM writeback after the finalize.
        out_specs=pl.BlockSpec((N, Cout, S), lambda n: (0, 0, 0)),
        compiler_params=pltpu.CompilerParams(
            # The batch axis carries the resident output + finalize, so it is
            # "arbitrary" (fusion was judged a bigger win than megacore here;
            # the per-tile-partials parallel variant belongs to the spill path).
            dimension_semantics=("arbitrary",),
            vmem_limit_bytes=vmem_limit,
        ),
        cost_estimate=cost,
    )(patches, w2d, gamma, beta)

    # [N, Cout, Ho*Wo] is already NCHW order: a free reshape, no transpose.
    return out.reshape(N, Cout, Ho, Wo)


# Pure-JAX reference (PyTorch semantics) used only as an in-script sanity check.
def _reference(x, w, b, gamma, beta, *, stride, padding, eps):
    y = lax.conv_general_dilated(
        x, w, window_strides=(stride, stride),
        padding=((padding, padding), (padding, padding)),
        dimension_numbers=("NCHW", "OIHW", "NCHW"),
        precision=lax.Precision.HIGHEST)
    y = y + b.reshape(1, -1, 1, 1)
    mean = jnp.mean(y, axis=(0, 2, 3), keepdims=True)
    var = jnp.mean((y - mean) ** 2, axis=(0, 2, 3), keepdims=True)
    z = gamma.reshape(1, -1, 1, 1) * (y - mean) * lax.rsqrt(var + eps) \
        + beta.reshape(1, -1, 1, 1)
    return 0.5 * z * (1.0 + lax.erf(z * (1.0 / math.sqrt(2.0))))


if __name__ == "__main__":
    key = jax.random.PRNGKey(0)
    k_x, k_w, k_b, k_g, k_be = jax.random.split(key, 5)

    # CBA(in_channels=4, out_channels=8, kernel_size=3, stride=2, padding=1)
    # applied to a [2, 4, 16, 16] NCHW input.
    N, Cin, H, W = 2, 4, 16, 16
    Cout, KH, KW = 8, 3, 3

    x = jax.random.normal(k_x, (N, Cin, H, W), dtype=jnp.float32)
    fan_in = Cin * KH * KW
    w = jax.random.normal(k_w, (Cout, Cin, KH, KW), dtype=jnp.float32) / math.sqrt(fan_in)
    b = jax.random.normal(k_b, (Cout,), dtype=jnp.float32) * 0.1
    gamma = 1.0 + 0.1 * jax.random.normal(k_g, (Cout,), dtype=jnp.float32)
    beta = 0.1 * jax.random.normal(k_be, (Cout,), dtype=jnp.float32)

    fwd = jax.jit(functools.partial(cba_forward, stride=2, padding=1, eps=1e-5))
    y = fwd(x, w, b, gamma, beta)
    jax.block_until_ready(y)

    assert y.shape == (N, Cout, H // 2, W // 2)

    ref = _reference(x, w, b, gamma, beta, stride=2, padding=1, eps=1e-5)
    max_err = float(jnp.max(jnp.abs(y - ref)))
    assert max_err < 5e-2, f"mismatch vs reference: max abs err = {max_err}"

    print("KERNEL_OK")
</pallas_src>

<mosaic_0001>
module attributes {stable_mosaic.version = 11 : i64} {
  func.func @_cba_fused_kernel(%arg0: i32, %arg1: memref<1x36x64xf32, #tpu.memory_space<vmem>>, %arg2: memref<8x36xf32, #tpu.memory_space<vmem>>, %arg3: memref<1x8x1xf32, #tpu.memory_space<vmem>>, %arg4: memref<1x8x1xf32, #tpu.memory_space<vmem>>, %arg5: memref<2x8x64xf32, #tpu.memory_space<vmem>>) attributes {dimension_semantics = [#tpu.dimension_semantics<arbitrary>], iteration_bounds = array<i64: 2>, scalar_prefetch = 0 : i64, scratch_operands = 0 : i64, tpu.core_type = #tpu.core_type<tc>, window_params = [{transform_indices = @transform_0, window_bounds = array<i64: 1, 36, 64>}, {pipeline_mode = #tpu.pipeline_mode<synchronous>, transform_indices = @transform_1, window_bounds = array<i64: 8, 36>}, {pipeline_mode = #tpu.pipeline_mode<synchronous>, transform_indices = @transform_2, window_bounds = array<i64: 1, 8, 1>}, {pipeline_mode = #tpu.pipeline_mode<synchronous>, transform_indices = @transform_3, window_bounds = array<i64: 1, 8, 1>}, {pipeline_mode = #tpu.pipeline_mode<synchronous>, transform_indices = @transform_4, window_bounds = array<i64: 2, 8, 64>}]} {
    %c0 = arith.constant 0 : index
    %c0_0 = arith.constant 0 : index
    %0 = vector.load %arg2[%c0, %c0_0] : memref<8x36xf32, #tpu.memory_space<vmem>>, vector<8x36xf32>
    %c0_1 = arith.constant 0 : index
    %c0_2 = arith.constant 0 : index
    %c0_3 = arith.constant 0 : index
    %1 = vector.load %arg1[%c0_1, %c0_2, %c0_3] : memref<1x36x64xf32, #tpu.memory_space<vmem>>, vector<1x36x64xf32>
    %2 = vector.shape_cast %1 : vector<1x36x64xf32> to vector<36x64xf32>
    %cst = arith.constant dense<0.000000e+00> : vector<8x64xf32>
    %3 = tpu.matmul %0, %2, %cst {dimension_numbers = #tpu.dot_dimension_numbers<[1], [0], [0], [1], [0, 0, 1, 1], [], []>} : vector<8x36xf32>, vector<36x64xf32>, vector<8x64xf32> -> vector<8x64xf32>
    %4 = arith.index_cast %arg0 : i32 to index
    %c0_4 = arith.constant 0 : index
    %c0_5 = arith.constant 0 : index
    %5 = vector.load %arg5[%4, %c0_4, %c0_5] : memref<2x8x64xf32, #tpu.memory_space<vmem>>, vector<1x8x64xf32>
    %6 = vector.shape_cast %5 : vector<1x8x64xf32> to vector<8x64xf32>
    %7 = vector.shape_cast %3 : vector<8x64xf32> to vector<1x8x64xf32>
    tpu.vector_store %arg5[%4, %c0_4, %c0_5], %7 {strides = array<i32>} : memref<2x8x64xf32, #tpu.memory_space<vmem>>, vector<1x8x64xf32>,
    %c1_i32 = arith.constant 1 : i32
    %8 = arith.cmpi eq, %arg0, %c1_i32 : i32
    %9 = arith.extui %8 : i1 to i32
    %c0_i32 = arith.constant 0 : i32
    %10 = arith.cmpi ne, %9, %c0_i32 : i32
    scf.if %10 {
      %c0_6 = arith.constant 0 : index
      %c0_7 = arith.constant 0 : index
      %c0_8 = arith.constant 0 : index
      %11 = vector.load %arg5[%c0_6, %c0_7, %c0_8] : memref<2x8x64xf32, #tpu.memory_space<vmem>>, vector<2x8x64xf32>
      %cst_9 = arith.constant dense<0.000000e+00> : vector<2x8xf32>
      %12 = vector.multi_reduction <add>, %11, %cst_9 [2] : vector<2x8x64xf32> to vector<2x8xf32>
      %13 = vector.shape_cast %12 : vector<2x8xf32> to vector<2x8x1xf32>
      %cst_10 = arith.constant dense<0.000000e+00> : vector<8x1xf32>
      %14 = vector.multi_reduction <add>, %13, %cst_10 [0] : vector<2x8x1xf32> to vector<8x1xf32>
      %15 = vector.shape_cast %14 : vector<8x1xf32> to vector<1x8x1xf32>
      %cst_11 = arith.constant 7.812500e-03 : f32
      %16 = vector.broadcast %cst_11 : f32 to vector<1x8x1xf32>
      %17 = arith.mulf %15, %16 : vector<1x8x1xf32>
      %18 = vector.broadcast %17 : vector<1x8x1xf32> to vector<2x8x64xf32>
      %19 = arith.subf %11, %18 : vector<2x8x64xf32>
      %20 = arith.mulf %19, %19 : vector<2x8x64xf32>
      %cst_12 = arith.constant dense<0.000000e+00> : vector<2x8xf32>
      %21 = vector.multi_reduction <add>, %20, %cst_12 [2] : vector<2x8x64xf32> to vector<2x8xf32>
      %22 = vector.shape_cast %21 : vector<2x8xf32> to vector<2x8x1xf32>
      %cst_13 = arith.constant dense<0.000000e+00> : vector<8x1xf32>
      %23 = vector.multi_reduction <add>, %22, %cst_13 [0] : vector<2x8x1xf32> to vector<8x1xf32>
      %24 = vector.shape_cast %23 : vector<8x1xf32> to vector<1x8x1xf32>
      %cst_14 = arith.constant 7.812500e-03 : f32
      %25 = vector.broadcast %cst_14 : f32 to vector<1x8x1xf32>
      %26 = arith.mulf %24, %25 : vector<1x8x1xf32>
      %c0_15 = arith.constant 0 : index
      %c0_16 = arith.constant 0 : index
      %c0_17 = arith.constant 0 : index
      %27 = vector.load %arg3[%c0_15, %c0_16, %c0_17] : memref<1x8x1xf32, #tpu.memory_space<vmem>>, vector<1x8x1xf32>
      %cst_18 = arith.constant 9.99999974E-6 : f32
      %28 = vector.broadcast %cst_18 : f32 to vector<1x8x1xf32>
      %29 = arith.addf %26, %28 : vector<1x8x1xf32>
      %30 = math.rsqrt %29 : vector<1x8x1xf32>
      %31 = arith.mulf %27, %30 : vector<1x8x1xf32>
      %c0_19 = arith.constant 0 : index
      %c0_20 = arith.constant 0 : index
      %c0_21 = arith.constant 0 : index
      %32 = vector.load %arg4[%c0_19, %c0_20, %c0_21] : memref<1x8x1xf32, #tpu.memory_space<vmem>>, vector<1x8x1xf32>
      %33 = arith.mulf %31, %17 : vector<1x8x1xf32>
      %34 = arith.subf %32, %33 : vector<1x8x1xf32>
      %35 = vector.broadcast %31 : vector<1x8x1xf32> to vector<2x8x64xf32>
      %36 = arith.mulf %11, %35 : vector<2x8x64xf32>
      %37 = vector.broadcast %34 : vector<1x8x1xf32> to vector<2x8x64xf32>
      %38 = arith.addf %36, %37 : vector<2x8x64xf32>
      %cst_22 = arith.constant 5.000000e-01 : f32
      %39 = vector.broadcast %cst_22 : f32 to vector<2x8x64xf32>
      %40 = arith.mulf %39, %38 : vector<2x8x64xf32>
      %cst_23 = arith.constant 0.707106769 : f32
      %41 = vector.broadcast %cst_23 : f32 to vector<2x8x64xf32>
      %42 = arith.mulf %38, %41 : vector<2x8x64xf32>
      %43 = math.erf %42 : vector<2x8x64xf32>
      %cst_24 = arith.constant 1.000000e+00 : f32
      %44 = vector.broadcast %cst_24 : f32 to vector<2x8x64xf32>
      %45 = arith.addf %44, %43 : vector<2x8x64xf32>
      %46 = arith.mulf %40, %45 : vector<2x8x64xf32>
      %c0_25 = arith.constant 0 : index
      %c0_26 = arith.constant 0 : index
      %c0_27 = arith.constant 0 : index
      %47 = vector.load %arg5[%c0_25, %c0_26, %c0_27] : memref<2x8x64xf32, #tpu.memory_space<vmem>>, vector<2x8x64xf32>
      tpu.vector_store %arg5[%c0_25, %c0_26, %c0_27], %46 {strides = array<i32>} : memref<2x8x64xf32, #tpu.memory_space<vmem>>, vector<2x8x64xf32>,
    } else {
    }
    return
  }
  func.func @transform_0(%arg0: i32) -> (i32, i32, i32) {
    %c0_i32 = arith.constant 0 : i32
    %c0_i32_0 = arith.constant 0 : i32
    %c0_i32_1 = arith.constant 0 : i32
    return %arg0, %c0_i32, %c0_i32_0 : i32, i32, i32
  }
  func.func @transform_1(%arg0: i32) -> (i32, i32) {
    %c0_i32 = arith.constant 0 : i32
    %c0_i32_0 = arith.constant 0 : i32
    %c0_i32_1 = arith.constant 0 : i32
    return %c0_i32, %c0_i32_0 : i32, i32
  }
  func.func @transform_2(%arg0: i32) -> (i32, i32, i32) {
    %c0_i32 = arith.constant 0 : i32
    %c0_i32_0 = arith.constant 0 : i32
    %c0_i32_1 = arith.constant 0 : i32
    %c0_i32_2 = arith.constant 0 : i32
    return %c0_i32, %c0_i32_0, %c0_i32_1 : i32, i32, i32
  }
  func.func @transform_3(%arg0: i32) -> (i32, i32, i32) {
    %c0_i32 = arith.constant 0 : i32
    %c0_i32_0 = arith.constant 0 : i32
    %c0_i32_1 = arith.constant 0 : i32
    %c0_i32_2 = arith.constant 0 : i32
    return %c0_i32, %c0_i32_0, %c0_i32_1 : i32, i32, i32
  }
  func.func @transform_4(%arg0: i32) -> (i32, i32, i32) {
    %c0_i32 = arith.constant 0 : i32
    %c0_i32_0 = arith.constant 0 : i32
    %c0_i32_1 = arith.constant 0 : i32
    %c0_i32_2 = arith.constant 0 : i32
    return %c0_i32, %c0_i32_0, %c0_i32_1 : i32, i32, i32
  }
}

</mosaic_0001>

<llo_original>
// kernel: cba_forward.1
$region0: #{cba_forward.1}
  #allocation0 [shape = 'u32[]', space=smem, size = 0x4, offset = 0x4, fixed_abs, tag = 'smem constant byte address 0x4 - core index']
  #allocation1 [shape = 'u32[144,128]{1,0:T(1,128)}', space=vmem, size = 0x12000, scoped, tag = 'internal scratch']
  %s0 = inlined_call_operand.vmem [shape: f32[2,36,64], index: 0, kind: input, shape index: {}]
  %s1 = inlined_call_operand.vmem [shape: f32[8,36], index: 1, kind: input, shape index: {}]
  %s2 = inlined_call_operand.vmem [shape: f32[1,8,1], index: 2, kind: input, shape index: {}]
  %s3 = inlined_call_operand.vmem [shape: f32[1,8,1], index: 3, kind: input, shape index: {}]
  %s4 = inlined_call_operand.vmem [shape: f32[2,8,64], index: 4, kind: output, shape index: {}]
  %s5 = sld [smem:[#allocation0]]
  $region53: #{cba_forward.1} parent=0
    _
  %s7 = ssub.s32 1, %s5
  %s8 = scalar_select 0, %s7, %s5
  loop: start=0, step=1, limit=4
  $region2: #{cba_forward.1} parent=0 // loop_pre_header
    _
  $region3: #{cba_forward.1} parent=0 // loop_header
    %s10 = sphi 0, %s14
    %p11 = scmp.ge.s32.totalorder %s10, 4
    %s20 = sphi 0, %s22
    %s23 = sphi 0, %s20
    %s24 = sphi 0, %s23
    %s40 = sphi 0, %s24
    %s44 = sphi 0, %s44
    %s46 = sphi 0, %s44
    %s47 = sphi 0, %s46
    %s61 = sphi 0, %s47
    %s65 = sphi 0, %s65
    %s67 = sphi 0, %s65
    %s68 = sphi 0, %s67
    %s82 = sphi 0, %s68
    %s86 = sphi 0, %s86
    %s88 = sphi 0, %s86
    %s89 = sphi 0, %s88
    %s103 = sphi 0, %s89
    %s107 = sphi 0, %s107
    %s109 = sphi 0, %s107
    %s110 = sphi 0, %s109
    %s124 = sphi 0, %s110
  $region4: #{cba_forward.1} parent=0 // loop_header_branch
    %13 = sbr.rel (%p11) target = $region8
  $region5: #{cba_forward.1} parent=0 // loop_body
    %s15 = ssub.s32 %s10, 1
    %s16 = ssub.s32 %s10, 2
    %s17 = sadd.s32 %s10, 1
    %s18 = ssub.s32 %s10, %s17
    %p19 = scmp.eq.s32.totalorder %s18, 0
    %s21 = sadd.s32 %s20, 1
    %s22 = scalar_select %p19, %s20, %s21
    %p25 = pneg %p19
    %p26 = scmp.eq.s32.totalorder %s10, 1
    %p27 = por %p25, %p26
    %p28 = scmp.ne.s32.totalorder %s20, %s23
    %p29 = scmp.eq.s32.totalorder %s10, 0
    %p30 = por %p28, %p29
    %p31 = scmp.ne.s32.totalorder %s20, %s23
    %p32 = scmp.eq.s32.totalorder %s15, 1
    %p33 = por %p31, %p32
    %p34 = scmp.ne.s32.totalorder %s23, %s24
    %p35 = scmp.eq.s32.totalorder %s15, 0
    %p36 = por %p34, %p35
    %p37 = scmp.ne.s32.totalorder %s23, %s24
    %p38 = scmp.eq.s32.totalorder %s16, 1
    %p39 = por %p37, %p38
    %p41 = scmp.ne.s32.totalorder %s24, %s40
    %p42 = scmp.eq.s32.totalorder %s16, 0
    %p43 = por %p41, %p42
    %s45 = sadd.s32 %s44, 1
    %p48 = scmp.eq.s32.totalorder %s10, 1
    %p49 = scmp.ne.s32.totalorder %s44, %s46
    %p50 = scmp.eq.s32.totalorder %s10, 0
    %p51 = por %p49, %p50
    %p52 = scmp.ne.s32.totalorder %s44, %s46
    %p53 = scmp.eq.s32.totalorder %s15, 1
    %p54 = por %p52, %p53
    %p55 = scmp.ne.s32.totalorder %s46, %s47
    %p56 = scmp.eq.s32.totalorder %s15, 0
    %p57 = por %p55, %p56
    %p58 = scmp.ne.s32.totalorder %s46, %s47
    %p59 = scmp.eq.s32.totalorder %s16, 1
    %p60 = por %p58, %p59
    %p62 = scmp.ne.s32.totalorder %s47, %s61
    %p63 = scmp.eq.s32.totalorder %s16, 0
    %p64 = por %p62, %p63
    %s66 = sadd.s32 %s65, 1
    %p69 = scmp.eq.s32.totalorder %s10, 1
    %p70 = scmp.ne.s32.totalorder %s65, %s67
    %p71 = scmp.eq.s32.totalorder %s10, 0
    %p72 = por %p70, %p71
    %p73 = scmp.ne.s32.totalorder %s65, %s67
    %p74 = scmp.eq.s32.totalorder %s15, 1
    %p75 = por %p73, %p74
    %p76 = scmp.ne.s32.totalorder %s67, %s68
    %p77 = scmp.eq.s32.totalorder %s15, 0
    %p78 = por %p76, %p77
    %p79 = scmp.ne.s32.totalorder %s67, %s68
    %p80 = scmp.eq.s32.totalorder %s16, 1
    %p81 = por %p79, %p80
    %p83 = scmp.ne.s32.totalorder %s68, %s82
    %p84 = scmp.eq.s32.totalorder %s16, 0
    %p85 = por %p83, %p84
    %s87 = sadd.s32 %s86, 1
    %p90 = scmp.eq.s32.totalorder %s10, 1
    %p91 = scmp.ne.s32.totalorder %s86, %s88
    %p92 = scmp.eq.s32.totalorder %s10, 0
    %p93 = por %p91, %p92
    %p94 = scmp.ne.s32.totalorder %s86, %s88
    %p95 = scmp.eq.s32.totalorder %s15, 1
    %p96 = por %p94, %p95
    %p97 = scmp.ne.s32.totalorder %s88, %s89
    %p98 = scmp.eq.s32.totalorder %s15, 0
    %p99 = por %p97, %p98
    %p100 = scmp.ne.s32.totalorder %s88, %s89
    %p101 = scmp.eq.s32.totalorder %s16, 1
    %p102 = por %p100, %p101
    %p104 = scmp.ne.s32.totalorder %s89, %s103
    %p105 = scmp.eq.s32.totalorder %s16, 0
    %p106 = por %p104, %p105
    %s108 = sadd.s32 %s107, 1
    %p111 = scmp.eq.s32.totalorder %s10, 1
    %p112 = scmp.ne.s32.totalorder %s107, %s109
    %p113 = scmp.eq.s32.totalorder %s10, 0
    %p114 = por %p112, %p113
    %p115 = scmp.ne.s32.totalorder %s107, %s109
    %p116 = scmp.eq.s32.totalorder %s15, 1
    %p117 = por %p115, %p116
    %p118 = scmp.ne.s32.totalorder %s109, %s110
    %p119 = scmp.eq.s32.totalorder %s15, 0
    %p120 = por %p118, %p119
    %p121 = scmp.ne.s32.totalorder %s109, %s110
    %p122 = scmp.eq.s32.totalorder %s16, 1
    %p123 = por %p121, %p122
    %p125 = scmp.ne.s32.totalorder %s110, %s124
    %p126 = scmp.eq.s32.totalorder %s16, 0
    %p127 = por %p125, %p126
    %p128 = scmp.le.s32.totalorder 1, %s10
    %p129 = scmp.lt.s32.totalorder %s10, 3
    %p130 = pnand %p128, %p129
    %p131 = pneg %p130
    // Predicated region
    $region9: #{cba_forward.1} parent=5 // pred_check
      _
    $region10: #{cba_forward.1} parent=5 // pred_check_branch
      %133 = sbr.rel (%p130) target = $region12
    $region11: #{cba_forward.1} parent=5 // pred_region
      %s134 = ssub.s32 %s10, 1
      // Predicated region
      $region13: #{cba_forward.1} parent=11 // pred_check
        %p135 = pneg %p57
      $region14: #{cba_forward.1} parent=11 // pred_check_branch
        %137 = sbr.rel (%p135) target = $region16
      $region15: #{cba_forward.1} parent=11 // pred_region
        _
      $region16: #{cba_forward.1} parent=11 // pred_fallthru
        _
      // Predicated region
      $region17: #{cba_forward.1} parent=11 // pred_check
        %p138 = pneg %p78
      $region18: #{cba_forward.1} parent=11 // pred_check_branch
        %140 = sbr.rel (%p138) target = $region20
      $region19: #{cba_forward.1} parent=11 // pred_region
        _
      $region20: #{cba_forward.1} parent=11 // pred_fallthru
        _
      // Predicated region
      $region21: #{cba_forward.1} parent=11 // pred_check
        %p141 = pneg %p99
      $region22: #{cba_forward.1} parent=11 // pred_check_branch
        %143 = sbr.rel (%p141) target = $region24
      $region23: #{cba_forward.1} parent=11 // pred_region
        _
      $region24: #{cba_forward.1} parent=11 // pred_fallthru
        _
    $region12: #{cba_forward.1} parent=5 // pred_fallthru
      _
    %p144 = scmp.lt.s32.totalorder %s10, 2
    // Predicated region
    $region25: #{cba_forward.1} parent=5 // pred_check
      %p145 = pneg %p144
    $region26: #{cba_forward.1} parent=5 // pred_check_branch
      %147 = sbr.rel (%p145) target = $region28
    $region27: #{cba_forward.1} parent=5 // pred_region
      // Predicated region
      $region29: #{cba_forward.1} parent=27 // pred_check
        %p148 = pneg %p30
      $region30: #{cba_forward.1} parent=27 // pred_check_branch
        %150 = sbr.rel (%p148) target = $region32
      $region31: #{cba_forward.1} parent=27 // pred_region
        %p151 = scmp.lt.s32.totalorder %s10, 1
        %s152 = scalar_select %p151, %s10, 1
        %s153 = smul.addr %s152, 5
        %s154 = smul.addr %s153, 8
        %s155 = scalar_lea.vmem %s0, %s154
      $region32: #{cba_forward.1} parent=27 // pred_fallthru
        _
    $region28: #{cba_forward.1} parent=5 // pred_fallthru
      _
    %p156 = scmp.le.s32.totalorder 1, %s10
    %p157 = scmp.lt.s32.totalorder %s10, 3
    %p158 = pnand %p156, %p157
    %p159 = pneg %p158
    // Predicated region
    $region33: #{cba_forward.1} parent=5 // pred_check
      _
    $region34: #{cba_forward.1} parent=5 // pred_check_branch
      %161 = sbr.rel (%p158) target = $region36
    $region35: #{cba_forward.1} parent=5 // pred_region
      %s162 = ssub.s32 %s10, 1
      %p163 = scmp.lt.s32.totalorder %s15, 1
      %s164 = scalar_select %p163, %s15, 1
      %s165 = smul.addr %s164, 5
      %s166 = smul.addr %s165, 8
      %s167 = scalar_lea.vmem %s0, %s166
      %p168 = pneg %p36
      %p169 = pneg %p33
      %p170 = pneg %p57
      %p171 = pneg %p54
      %p172 = pneg %p78
      %p173 = pneg %p75
      %p174 = pneg %p99
      %p175 = pneg %p96
      %p176 = pneg %p120
      %p177 = pneg %p117
      %p178 = scmp.lt.s32.totalorder %s15, 1
      %s179 = scalar_select %p178, %s15, 1
      %s180 = smul.addr %s179, 5
      %s181 = smul.addr %s180, 8
      %s182 = scalar_lea.vmem %s0, %s181
      %v183 = vld [vmem:[%s1] sm:$0xff]
      %v184 = vld [vmem:[%s182] sm:$0xff]
      %v185 = vld [vmem:[%s182 + $0x8] sm:$0xff]
      %v186 = vld [vmem:[%s182 + $0x10] sm:$0xff]
      %v187 = vld [vmem:[%s182 + $0x18] sm:$0xff]
      %v188 = vld [vmem:[%s182 + $0x20] sm:$0xf]
      %vm189 = vcmask 293888
      %v191 = vsel %vm189, %v183, 0
      %vm193 = vcmask 1043456
      %v195 = vsel %vm193, %v188, 0
      %197 = vmatprep.subr.mxu0 0.0
      %198 = vmatpush1.msra.mxu0 %v184
      %199 = vmatprep.subr.mxu0 0.0
      %200 = vmatpush1.msra.mxu0 %v185
      %201 = vmatprep.subr.mxu0 0.0
      %202 = vmatpush1.msra.mxu0 %v186
      %203 = vmatprep.subr.mxu0 0.0
      %204 = vmatpush1.msra.mxu0 %v187
      %205 = vmatprep.subr.mxu0 0.0
      %206 = vmatpush1.msra.mxu0 %v195
      %207 = vmatprep.subr.mxu0 0.0
      %208 = vmatpush1.msra.mxu0 0.0
      %209 = vmatprep.subr.mxu0 0.0
      %210 = vmatpush1.msra.mxu0 0.0
      %211 = vmatprep.subr.mxu0 0.0
      %212 = vmatpush1.msra.mxu0 0.0
      %213 = vmatprep.subr.mxu0 0.0
      %214 = vmatpush1.msra.mxu0 0.0
      %215 = vmatprep.subr.mxu0 0.0
      %216 = vmatpush1.msra.mxu0 0.0
      %217 = vmatprep.subr.mxu0 0.0
      %218 = vmatpush1.msra.mxu0 0.0
      %219 = vmatprep.subr.mxu0 0.0
      %220 = vmatpush1.msra.mxu0 0.0
      %221 = vmatprep.subr.mxu0 0.0
      %222 = vmatpush1.msra.mxu0 0.0
      %223 = vmatprep.subr.mxu0 0.0
      %224 = vmatpush1.msra.mxu0 0.0
      %225 = vmatprep.subr.mxu0 0.0
      %226 = vmatpush1.msra.mxu0 0.0
      %227 = vmatprep.subr.mxu0 0.0
      %228 = vmatpush1.msra.mxu0 0.0
      %229 = vmatprep.subr.mxu0 0.0
      %230 = vmatpush1.msra.mxu0 0.0
      %231 = vmatprep.subr.mxu0 0.0
      %232 = vmatpush1.msra.mxu0 0.0
      %233 = vmatprep.subr.mxu0 0.0
      %234 = vmatpush1.msra.mxu0 0.0
      %235 = vmatprep.subr.mxu0 0.0
      %236 = vmatpush1.msra.mxu0 0.0
      %237 = vmatprep.subr.mxu0 0.0
      %238 = vmatpush1.msra.mxu0 0.0
      %239 = vmatprep.subr.mxu0 0.0
      %240 = vmatpush1.msra.mxu0 0.0
      %241 = vmatprep.subr.mxu0 0.0
      %242 = vmatpush1.msra.mxu0 0.0
      %243 = vmatprep.subr.mxu0 0.0
      %244 = vmatpush1.msra.mxu0 0.0
      %245 = vmatprep.subr.mxu0 0.0
      %246 = vmatpush1.msra.mxu0 0.0
      %247 = vmatprep.subr.mxu0 0.0
      %248 = vmatpush1.msra.mxu0 0.0
      %249 = vmatprep.subr.mxu0 0.0
      %250 = vmatpush1.msra.mxu0 0.0
      %251 = vmatprep.subr.mxu0 0.0
      %252 = vmatpush1.msra.mxu0 0.0
      %253 = vmatprep.subr.mxu0 0.0
      %254 = vmatpush1.msra.mxu0 0.0
      %255 = vmatprep.subr.mxu0 0.0
      %256 = vmatpush1.msra.mxu0 0.0
      %257 = vmatprep.subr.mxu0 0.0
      %258 = vmatpush1.msra.mxu0 0.0
      %259 = vmatprep.subr.mxu0 0.0
      %260 = vmatpush1.msra.mxu0 0.0
      %261 = vmatprep.mubr.f32.mxu0 0.0
      %262 = vmatmul.mubr.f32.gmra.mrb[0].mxu0 %v191
      %v263 = vpop.f32.mrb[0].mxu0
      %v264 = vadd.f32 0.0, %v263
      %v265 = vpop.f32.mrb[0].mxu0
      %266 = vdwg.mxu0
      %s267 = smul.u32 %s15, 8
      %s268 = scalar_lea.vmem %s4, %s267
      %vm269 = vcmask 523264
      %270 = vst.msk [vmem:[%s268] sm:$0xff] %vm269, %v264
      %p271 = scmp.eq.s32.totalorder %s15, 1
      // Predicated region
      $region37: #{cba_forward.1} parent=35 // pred_check
        %p272 = pneg %p271
      $region38: #{cba_forward.1} parent=35 // pred_check_branch
        %274 = sbr.rel (%p272) target = $region40
      $region39: #{cba_forward.1} parent=35 // pred_region
        %v275 = vld [vmem:[%s4] sm:$0xff]
        %v276 = vld [vmem:[%s4 + $0x8] sm:$0xff]
        %v277 = vsel %vm269, %v275, 0.0
        %278 = vadd.xlane.f32.xlu0 %v277
        %v279 = vpop.xlane.xlu0 %278
        %v280 = vsel %vm269, %v276, 0.0
        %281 = vadd.xlane.f32.xlu0 %v280
        %v282 = vpop.xlane.xlu0 %281
        %v283 = vadd.f32 %v279, %v282
        %v284 = vmul.f32 %v283, 0.0078125
        %v285 = vsub.f32 %v275, %v284
        %v286 = vsub.f32 %v276, %v284
        %v287 = vmul.f32 %v285, %v285
        %v288 = vmul.f32 %v286, %v286
        %v289 = vsel %vm269, %v287, 0.0
        %290 = vadd.xlane.f32.xlu0 %v289
        %v291 = vpop.xlane.xlu0 %290
        %v292 = vsel %vm269, %v288, 0.0
        %293 = vadd.xlane.f32.xlu0 %v292
        %v294 = vpop.xlane.xlu0 %293
        %v295 = vadd.f32 %v291, %v294
        %v296 = vmul.f32 %v295, 0.0078125
        %v297 = vld [vmem:[%s2] sm:$0xff]
        %v298 = vadd.f32 %v296, 1e-05
        %v299 = vrsqrt.pop %v298
        %v300 = vmul.f32 %v297, %v299
        %v301 = vld [vmem:[%s3] sm:$0xff]
        %v302 = vmul.f32 %v300, %v284
        %v303 = vsub.f32 %v301, %v302
        %305 = vset.pattern.permute.xlu0 0
        %306 = vperm.xlu0 %305, %v300
        %v307 = vpop.permute.xlu0 %306
        %v309 = vmul.f32 %v275, %v307
        %v310 = vmul.f32 %v276, %v307
        %312 = vset.pattern.permute.xlu0 0
        %313 = vperm.xlu0 %312, %v303
        %v314 = vpop.permute.xlu0 %313
        %v316 = vadd.f32 %v309, %v314
        %v317 = vadd.f32 %v310, %v314
        %v318 = vmul.f32 %v316, 0.5
        %v319 = vmul.f32 %v317, 0.5
        %v320 = vmul.f32 %v316, 0.70710677
        %v321 = vmul.f32 %v317, 0.70710677
        %v322 = verf.f32.pop %v320
        %v323 = verf.f32.pop %v321
        %v324 = vadd.f32 %v322, 1.0
        %v325 = vadd.f32 %v323, 1.0
        %v326 = vmul.f32 %v318, %v324
        %v327 = vmul.f32 %v319, %v325
        %328 = vst.msk [vmem:[%s4] sm:$0xff] %vm269, %v326
        %329 = vst.msk [vmem:[%s4 + $0x8] sm:$0xff] %vm269, %v327
      $region40: #{cba_forward.1} parent=35 // pred_fallthru
        _
      // Predicated region
      $region41: #{cba_forward.1} parent=35 // pred_check
        %p330 = pneg %p117
      $region42: #{cba_forward.1} parent=35 // pred_check_branch
        %332 = sbr.rel (%p330) target = $region44
      $region43: #{cba_forward.1} parent=35 // pred_region
        _
      $region44: #{cba_forward.1} parent=35 // pred_fallthru
        _
      // Predicated region
      $region45: #{cba_forward.1} parent=35 // pred_check
        %p333 = pneg %p117
      $region46: #{cba_forward.1} parent=35 // pred_check_branch
        %335 = sbr.rel (%p333) target = $region48
      $region47: #{cba_forward.1} parent=35 // pred_region
        _
      $region48: #{cba_forward.1} parent=35 // pred_fallthru
        _
    $region36: #{cba_forward.1} parent=5 // pred_fallthru
      _
    %p336 = scmp.le.s32.totalorder 2, %s10
    // Predicated region
    $region49: #{cba_forward.1} parent=5 // pred_check
      %p337 = pneg %p336
    $region50: #{cba_forward.1} parent=5 // pred_check_branch
      %339 = sbr.rel (%p337) target = $region52
    $region51: #{cba_forward.1} parent=5 // pred_region
      %s340 = ssub.s32 %s10, 2
    $region52: #{cba_forward.1} parent=5 // pred_fallthru
      _
  $region6: #{cba_forward.1} parent=0 // loop_footer
    %s14 = sadd.s32 1, %s10
  $region7: #{cba_forward.1} parent=0 // loop_footer_branch
    %9 = sbr.rel target = $region3
  $region8: #{cba_forward.1} parent=0 // loop_exit
    _

</llo_original>
